<compile_context>
chip_gen: v7x
topology: tpu7x:2x2x1
jax: 0.10.0
libtpu: 0.0.40
codegen_flags: <defaults>
</compile_context>

<pallas_src>
import jax
import jax.numpy as jnp
from jax.experimental import pallas as pl
from jax.experimental.pallas import tpu as pltpu

LANE_CHUNK = 512      # in-kernel sub-chunk of the lane (batch) axis
MAX_TILE_B = 8192     # per-grid-step lane width cap (VMEM footprint stays a few MiB)


def _pick_tile_b(batch: int) -> int:
    """Lane-tile width: aim for >=2 grid tiles (v7x megacore), multiple of LANE_CHUNK."""
    half = -(-batch // 2)                                # ceil(B/2)
    tile = -(-half // LANE_CHUNK) * LANE_CHUNK           # round up to chunk multiple
    return max(LANE_CHUNK, min(MAX_TILE_B, tile))


def _mlp_kernel(x_ref, w1_ref, b1_ref, w2_ref, b2_ref, w3_ref, b3_ref, o_ref):
    # Weights/biases are VMEM-resident (constant index_maps); load once per grid step.
    w1 = w1_ref[...]            # (64, 3)   f32
    b1 = b1_ref[...]            # (64, 1)   f32
    w2 = w2_ref[...]            # (64, 64)  bf16
    b2 = b2_ref[...]            # (64, 1)   f32
    w3 = w3_ref[...]            # (64, 1)   f32  (fc3 weights as a column)
    b3 = b3_ref[0]              # scalar    f32  (SMEM)

    tile = x_ref.shape[1]       # static; always a multiple of LANE_CHUNK

    # Static, fully-unrolled lane-chunk loop: constant addressing, bounded h1/h2 live
    # ranges (~128 KiB per chunk) regardless of how large the grid tile is.
    for j in range(0, tile, LANE_CHUNK):
        x = x_ref[:, j:j + LANE_CHUNK]                        # (3, C) f32

        # fc1 + relu: K=3 would waste MXU systolic depth -> 3 broadcast FMAs on the VPU.
        h1 = (w1[:, 0:1] * x[0:1, :]
              + w1[:, 1:2] * x[1:2, :]
              + w1[:, 2:3] * x[2:3, :]
              + b1)                                           # (64, C) f32
        h1 = jnp.maximum(h1, 0.0)

        # fc2 + relu: bf16 operands, f32 accumulation on the MXU (single-pass native).
        h2 = jnp.dot(w2, h1.astype(jnp.bfloat16),
                     preferred_element_type=jnp.float32) + b2  # (64, C) f32
        h2 = jnp.maximum(h2, 0.0)

        # fc3: broadcast-mul + sublane reduce (VPU/XLU slots), not a second MXU pass.
        out = jnp.sum(w3 * h2, axis=0, keepdims=True) + b3     # (1, C) f32
        o_ref[:, j:j + LANE_CHUNK] = out.astype(o_ref.dtype)


@jax.jit
def car_price_model(x, params):
    """x: (B, 3) float32. params: PyTorch-layout weights/biases (see init_params)."""
    B = x.shape[0]
    tile = _pick_tile_b(B)
    nb = -(-B // tile)                 # ceil-div, static
    B_pad = nb * tile

    # Feature-major, lane-dense input: (3, B_pad). Under jit the pad + transpose fuse
    # into one relayout pass; zero pad columns produce garbage outputs that are sliced off.
    # TODO(synk): stage x feature-major (3, B) upstream to remove this relayout entirely.
    x_t = jnp.pad(x, ((0, B_pad - B), (0, 0))).T              # (3, B_pad)

    vmem = pltpu.MemorySpace.VMEM
    smem = pltpu.MemorySpace.SMEM

    out_t = pl.pallas_call(
        _mlp_kernel,
        out_shape=jax.ShapeDtypeStruct((1, B_pad), jnp.float32),
        grid=(nb,),
        in_specs=[
            # activations: tiled along the batch/lane axis, auto double-buffered
            pl.BlockSpec((3, tile), lambda i: (0, i), memory_space=vmem),
            # weights/biases: full arrays, constant index_map -> VMEM-resident
            pl.BlockSpec((64, 3), lambda i: (0, 0), memory_space=vmem),    # w1 (out,in)
            pl.BlockSpec((64, 1), lambda i: (0, 0), memory_space=vmem),    # b1
            pl.BlockSpec((64, 64), lambda i: (0, 0), memory_space=vmem),   # w2 (bf16)
            pl.BlockSpec((64, 1), lambda i: (0, 0), memory_space=vmem),    # b2
            pl.BlockSpec((64, 1), lambda i: (0, 0), memory_space=vmem),    # w3 column
            pl.BlockSpec(memory_space=smem),                               # b3 scalar
        ],
        out_specs=pl.BlockSpec((1, tile), lambda i: (0, i), memory_space=vmem),
        compiler_params=pltpu.CompilerParams(
            dimension_semantics=("parallel",),      # shard batch tiles across v7x's 2 TCs
            vmem_limit_bytes=32 * 1024 * 1024,      # generous; footprint is a few MiB
        ),
    )(
        x_t,
        params["w1"], params["b1"],
        params["w2"].astype(jnp.bfloat16), params["b2"],
        params["w3"].reshape(64, 1),        # (1,64) row -> (64,1) column (same bytes)
        params["b3"],
    )

    # (1, B) row and (B, 1) column are the same contiguous bytes: slice + reshape,
    # no transpose op on the output path.
    return out_t[0, :B][:, None]


def init_params(key):
    """nn.Linear-style U(-1/sqrt(fan_in), 1/sqrt(fan_in)) init, PyTorch (out,in) layout."""
    def linear(key, fan_in, fan_out):
        kw, kb = jax.random.split(key)
        bound = 1.0 / jnp.sqrt(fan_in)
        w = jax.random.uniform(kw, (fan_out, fan_in), jnp.float32, -bound, bound)
        b = jax.random.uniform(kb, (fan_out, 1), jnp.float32, -bound, bound)
        return w, b

    k1, k2, k3 = jax.random.split(key, 3)
    w1, b1 = linear(k1, 3, 64)
    w2, b2 = linear(k2, 64, 64)
    w3, b3 = linear(k3, 64, 1)
    return {
        "w1": w1, "b1": b1,
        "w2": w2, "b2": b2,
        "w3": w3, "b3": b3.reshape((1,)),   # b3 as a flat scalar for SMEM
    }


def _reference(x, p):
    h1 = jnp.maximum(x @ p["w1"].T + p["b1"][:, 0], 0.0)
    h2 = jnp.maximum(h1 @ p["w2"].T + p["b2"][:, 0], 0.0)
    return h2 @ p["w3"].T + p["b3"]


if __name__ == "__main__":
    key = jax.random.PRNGKey(0)
    k_params, k_x = jax.random.split(key)
    params = init_params(k_params)

    batch = 8
    x = jax.random.normal(k_x, (batch, 3), jnp.float32)

    out = car_price_model(x, params)
    jax.block_until_ready(out)

    ref = _reference(x, params)
    assert out.shape == (batch, 1)
    # fc2 runs with bf16 operands (f32 accumulate), so tolerance is relaxed vs pure f32.
    assert jnp.allclose(out, ref, atol=2e-2, rtol=2e-2)

    print("KERNEL_OK")
</pallas_src>

<mosaic_0001>
module attributes {stable_mosaic.version = 11 : i64} {
  func.func @_mlp_kernel(%arg0: i32, %arg1: memref<3x512xf32, #tpu.memory_space<vmem>>, %arg2: memref<64x3xf32, #tpu.memory_space<vmem>>, %arg3: memref<64x1xf32, #tpu.memory_space<vmem>>, %arg4: memref<64x64xbf16, #tpu.memory_space<vmem>>, %arg5: memref<64x1xf32, #tpu.memory_space<vmem>>, %arg6: memref<64x1xf32, #tpu.memory_space<vmem>>, %arg7: memref<1xf32, #tpu.memory_space<smem>>, %arg8: memref<1x512xf32, #tpu.memory_space<vmem>>) attributes {dimension_semantics = [#tpu.dimension_semantics<parallel>], iteration_bounds = array<i64: 1>, scalar_prefetch = 0 : i64, scratch_operands = 0 : i64, tpu.core_type = #tpu.core_type<tc>, window_params = [{transform_indices = @transform_0, window_bounds = array<i64: 3, 512>}, {pipeline_mode = #tpu.pipeline_mode<synchronous>, transform_indices = @transform_1, window_bounds = array<i64: 64, 3>}, {pipeline_mode = #tpu.pipeline_mode<synchronous>, transform_indices = @transform_2, window_bounds = array<i64: 64, 1>}, {pipeline_mode = #tpu.pipeline_mode<synchronous>, transform_indices = @transform_3, window_bounds = array<i64: 64, 64>}, {pipeline_mode = #tpu.pipeline_mode<synchronous>, transform_indices = @transform_4, window_bounds = array<i64: 64, 1>}, {pipeline_mode = #tpu.pipeline_mode<synchronous>, transform_indices = @transform_5, window_bounds = array<i64: 64, 1>}, {transform_indices = @transform_6, window_bounds = array<i64: 1>}, {transform_indices = @transform_7, window_bounds = array<i64: 1, 512>}]} {
    %c0 = arith.constant 0 : index
    %c0_0 = arith.constant 0 : index
    %0 = vector.load %arg2[%c0, %c0_0] : memref<64x3xf32, #tpu.memory_space<vmem>>, vector<64x3xf32>
    %c0_1 = arith.constant 0 : index
    %c0_2 = arith.constant 0 : index
    %1 = vector.load %arg3[%c0_1, %c0_2] : memref<64x1xf32, #tpu.memory_space<vmem>>, vector<64x1xf32>
    %c0_3 = arith.constant 0 : index
    %c0_4 = arith.constant 0 : index
    %2 = vector.load %arg4[%c0_3, %c0_4] : memref<64x64xbf16, #tpu.memory_space<vmem>>, vector<64x64xbf16>
    %c0_5 = arith.constant 0 : index
    %c0_6 = arith.constant 0 : index
    %3 = vector.load %arg5[%c0_5, %c0_6] : memref<64x1xf32, #tpu.memory_space<vmem>>, vector<64x1xf32>
    %c0_7 = arith.constant 0 : index
    %c0_8 = arith.constant 0 : index
    %4 = vector.load %arg6[%c0_7, %c0_8] : memref<64x1xf32, #tpu.memory_space<vmem>>, vector<64x1xf32>
    %c0_9 = arith.constant 0 : index
    %5 = memref.load %arg7[%c0_9] : memref<1xf32, #tpu.memory_space<smem>>
    %c0_10 = arith.constant 0 : index
    %c0_11 = arith.constant 0 : index
    %6 = vector.load %arg1[%c0_10, %c0_11] : memref<3x512xf32, #tpu.memory_space<vmem>>, vector<3x512xf32>
    %7 = vector.extract_strided_slice %0 {offsets = [0, 0], sizes = [64, 1], strides = [1, 1]} : vector<64x3xf32> to vector<64x1xf32>
    %8 = vector.extract_strided_slice %6 {offsets = [0, 0], sizes = [1, 512], strides = [1, 1]} : vector<3x512xf32> to vector<1x512xf32>
    %9 = vector.broadcast %7 : vector<64x1xf32> to vector<64x512xf32>
    %10 = vector.broadcast %8 : vector<1x512xf32> to vector<64x512xf32>
    %11 = arith.mulf %9, %10 : vector<64x512xf32>
    %12 = vector.extract_strided_slice %0 {offsets = [0, 1], sizes = [64, 1], strides = [1, 1]} : vector<64x3xf32> to vector<64x1xf32>
    %13 = vector.extract_strided_slice %6 {offsets = [1, 0], sizes = [1, 512], strides = [1, 1]} : vector<3x512xf32> to vector<1x512xf32>
    %14 = vector.broadcast %12 : vector<64x1xf32> to vector<64x512xf32>
    %15 = vector.broadcast %13 : vector<1x512xf32> to vector<64x512xf32>
    %16 = arith.mulf %14, %15 : vector<64x512xf32>
    %17 = arith.addf %11, %16 : vector<64x512xf32>
    %18 = vector.extract_strided_slice %0 {offsets = [0, 2], sizes = [64, 1], strides = [1, 1]} : vector<64x3xf32> to vector<64x1xf32>
    %19 = vector.extract_strided_slice %6 {offsets = [2, 0], sizes = [1, 512], strides = [1, 1]} : vector<3x512xf32> to vector<1x512xf32>
    %20 = vector.broadcast %18 : vector<64x1xf32> to vector<64x512xf32>
    %21 = vector.broadcast %19 : vector<1x512xf32> to vector<64x512xf32>
    %22 = arith.mulf %20, %21 : vector<64x512xf32>
    %23 = arith.addf %17, %22 : vector<64x512xf32>
    %24 = vector.broadcast %1 : vector<64x1xf32> to vector<64x512xf32>
    %25 = arith.addf %23, %24 : vector<64x512xf32>
    %cst = arith.constant 0.000000e+00 : f32
    %26 = vector.broadcast %cst : f32 to vector<64x512xf32>
    %27 = arith.maximumf %25, %26 : vector<64x512xf32>
    %28 = arith.truncf %27 : vector<64x512xf32> to vector<64x512xbf16>
    %cst_12 = arith.constant dense<0.000000e+00> : vector<64x512xf32>
    %29 = tpu.matmul %2, %28, %cst_12 {dimension_numbers = #tpu.dot_dimension_numbers<[1], [0], [0], [1], [0, 0, 1, 1], [], []>} : vector<64x64xbf16>, vector<64x512xbf16>, vector<64x512xf32> -> vector<64x512xf32>
    %30 = vector.broadcast %3 : vector<64x1xf32> to vector<64x512xf32>
    %31 = arith.addf %29, %30 : vector<64x512xf32>
    %cst_13 = arith.constant 0.000000e+00 : f32
    %32 = vector.broadcast %cst_13 : f32 to vector<64x512xf32>
    %33 = arith.maximumf %31, %32 : vector<64x512xf32>
    %34 = vector.broadcast %4 : vector<64x1xf32> to vector<64x512xf32>
    %35 = arith.mulf %34, %33 : vector<64x512xf32>
    %cst_14 = arith.constant dense<0.000000e+00> : vector<512xf32>
    %36 = vector.multi_reduction <add>, %35, %cst_14 [0] : vector<64x512xf32> to vector<512xf32>
    %37 = vector.shape_cast %36 : vector<512xf32> to vector<1x512xf32>
    %38 = vector.broadcast %5 : f32 to vector<1x512xf32>
    %39 = arith.addf %37, %38 : vector<1x512xf32>
    %c0_15 = arith.constant 0 : index
    %c0_16 = arith.constant 0 : index
    %40 = vector.load %arg8[%c0_15, %c0_16] : memref<1x512xf32, #tpu.memory_space<vmem>>, vector<1x512xf32>
    tpu.vector_store %arg8[%c0_15, %c0_16], %39 {strides = array<i32>} : memref<1x512xf32, #tpu.memory_space<vmem>>, vector<1x512xf32>,
    return
  }
  func.func @transform_0(%arg0: i32) -> (i32, i32) {
    %c0_i32 = arith.constant 0 : i32
    %c0_i32_0 = arith.constant 0 : i32
    return %c0_i32, %arg0 : i32, i32
  }
  func.func @transform_1(%arg0: i32) -> (i32, i32) {
    %c0_i32 = arith.constant 0 : i32
    %c0_i32_0 = arith.constant 0 : i32
    %c0_i32_1 = arith.constant 0 : i32
    return %c0_i32, %c0_i32_0 : i32, i32
  }
  func.func @transform_2(%arg0: i32) -> (i32, i32) {
    %c0_i32 = arith.constant 0 : i32
    %c0_i32_0 = arith.constant 0 : i32
    %c0_i32_1 = arith.constant 0 : i32
    return %c0_i32, %c0_i32_0 : i32, i32
  }
  func.func @transform_3(%arg0: i32) -> (i32, i32) {
    %c0_i32 = arith.constant 0 : i32
    %c0_i32_0 = arith.constant 0 : i32
    %c0_i32_1 = arith.constant 0 : i32
    return %c0_i32, %c0_i32_0 : i32, i32
  }
  func.func @transform_4(%arg0: i32) -> (i32, i32) {
    %c0_i32 = arith.constant 0 : i32
    %c0_i32_0 = arith.constant 0 : i32
    %c0_i32_1 = arith.constant 0 : i32
    return %c0_i32, %c0_i32_0 : i32, i32
  }
  func.func @transform_5(%arg0: i32) -> (i32, i32) {
    %c0_i32 = arith.constant 0 : i32
    %c0_i32_0 = arith.constant 0 : i32
    %c0_i32_1 = arith.constant 0 : i32
    return %c0_i32, %c0_i32_0 : i32, i32
  }
  func.func @transform_6(%arg0: i32) -> i32 {
    %c0_i32 = arith.constant 0 : i32
    %c0_i32_0 = arith.constant 0 : i32
    return %c0_i32 : i32
  }
  func.func @transform_7(%arg0: i32) -> (i32, i32) {
    %c0_i32 = arith.constant 0 : i32
    %c0_i32_0 = arith.constant 0 : i32
    return %c0_i32, %arg0 : i32, i32
  }
}

</mosaic_0001>

<llo_original>
// kernel: car_price_model.1
$region0: #{car_price_model.1}
  #allocation0 [shape = 'u32[]', space=smem, size = 0x4, offset = 0x4, fixed_abs, tag = 'smem constant byte address 0x4 - core index']
  #allocation1 [shape = 'u32[144,128]{1,0:T(1,128)}', space=vmem, size = 0x12000, scoped, tag = 'internal scratch']
  #allocation2 [shape = 'f32[1]{0:T(128)S(6)}', space=smem, size = 0x200, scoped, tag = 'scoped memory for car_price_model.1']
  %s0 = inlined_call_operand.vmem [shape: f32[3,512], index: 0, kind: input, shape index: {}]
  %s1 = inlined_call_operand.vmem [shape: f32[64,3], index: 1, kind: input, shape index: {}]
  %s2 = inlined_call_operand.vmem [shape: f32[64,1], index: 2, kind: input, shape index: {}]
  %s3 = inlined_call_operand.vmem [shape: bf16[64,64], index: 3, kind: input, shape index: {}]
  %s4 = inlined_call_operand.vmem [shape: f32[64,1], index: 4, kind: input, shape index: {}]
  %s5 = inlined_call_operand.vmem [shape: f32[64,1], index: 5, kind: input, shape index: {}]
  %s6 = inlined_call_operand.<no memory space> [shape: f32[1], index: 6, kind: input, shape index: {}]
  %s7 = inlined_call_operand.vmem [shape: f32[1,512], index: 7, kind: output, shape index: {}]
  %s8 = sld [smem:[#allocation0]]
  $region38: #{car_price_model.1} parent=0
    _
  %s10 = ssub.s32 1, %s8
  %s11 = scalar_select 0, %s10, %s8
  %12 = sst [smem:[#allocation2]] %s6
  // Predicated region
  $region2: #{car_price_model.1} parent=0 // pred_check
    _
  $region3: #{car_price_model.1} parent=0 // pred_check_branch
    %14 = sbr.rel (0) target = $region5
  $region4: #{car_price_model.1} parent=0 // pred_region
    _
  $region5: #{car_price_model.1} parent=0 // pred_fallthru
    _
  // Predicated region
  $region6: #{car_price_model.1} parent=0 // pred_check
    _
  $region7: #{car_price_model.1} parent=0 // pred_check_branch
    %16 = sbr.rel (0) target = $region9
  $region8: #{car_price_model.1} parent=0 // pred_region
    _
  $region9: #{car_price_model.1} parent=0 // pred_fallthru
    _
  // Predicated region
  $region10: #{car_price_model.1} parent=0 // pred_check
    _
  $region11: #{car_price_model.1} parent=0 // pred_check_branch
    %18 = sbr.rel (0) target = $region13
  $region12: #{car_price_model.1} parent=0 // pred_region
    _
  $region13: #{car_price_model.1} parent=0 // pred_fallthru
    _
  // Predicated region
  $region14: #{car_price_model.1} parent=0 // pred_check
    _
  $region15: #{car_price_model.1} parent=0 // pred_check_branch
    %20 = sbr.rel (0) target = $region17
  $region16: #{car_price_model.1} parent=0 // pred_region
    _
  $region17: #{car_price_model.1} parent=0 // pred_fallthru
    _
  // Predicated region
  $region18: #{car_price_model.1} parent=0 // pred_check
    _
  $region19: #{car_price_model.1} parent=0 // pred_check_branch
    %22 = sbr.rel (0) target = $region21
  $region20: #{car_price_model.1} parent=0 // pred_region
    _
  $region21: #{car_price_model.1} parent=0 // pred_fallthru
    _
  // Predicated region
  $region22: #{car_price_model.1} parent=0 // pred_check
    _
  $region23: #{car_price_model.1} parent=0 // pred_check_branch
    %24 = sbr.rel (0) target = $region25
  $region24: #{car_price_model.1} parent=0 // pred_region
    _
  $region25: #{car_price_model.1} parent=0 // pred_fallthru
    _
  // Predicated region
  $region26: #{car_price_model.1} parent=0 // pred_check
    _
  $region27: #{car_price_model.1} parent=0 // pred_check_branch
    %26 = sbr.rel (0) target = $region29
  $region28: #{car_price_model.1} parent=0 // pred_region
    _
  $region29: #{car_price_model.1} parent=0 // pred_fallthru
    _
  %v28 = vld [vmem:[%s1] sm:$0xff]
  %v29 = vld [vmem:[%s1 + $0x8] sm:$0xff]
  %v30 = vld [vmem:[%s1 + $0x10] sm:$0xff]
  %v31 = vld [vmem:[%s1 + $0x18] sm:$0xff]
  %v32 = vld [vmem:[%s1 + $0x20] sm:$0xff]
  %v33 = vld [vmem:[%s1 + $0x28] sm:$0xff]
  %v34 = vld [vmem:[%s1 + $0x30] sm:$0xff]
  %v35 = vld [vmem:[%s1 + $0x38] sm:$0xff]
  %v36 = vld [vmem:[%s2] sm:$0xff]
  %v37 = vld [vmem:[%s2 + $0x8] sm:$0xff]
  %v38 = vld [vmem:[%s2 + $0x10] sm:$0xff]
  %v39 = vld [vmem:[%s2 + $0x18] sm:$0xff]
  %v40 = vld [vmem:[%s2 + $0x20] sm:$0xff]
  %v41 = vld [vmem:[%s2 + $0x28] sm:$0xff]
  %v42 = vld [vmem:[%s2 + $0x30] sm:$0xff]
  %v43 = vld [vmem:[%s2 + $0x38] sm:$0xff]
  %v44 = vld [vmem:[%s3] sm:$0xf]
  %v45 = vld [vmem:[%s3 + $0x4] sm:$0xf]
  %v46 = vld [vmem:[%s3 + $0x8] sm:$0xf]
  %v47 = vld [vmem:[%s3 + $0xc] sm:$0xf]
  %v48 = vld [vmem:[%s3 + $0x10] sm:$0xf]
  %v49 = vld [vmem:[%s3 + $0x14] sm:$0xf]
  %v50 = vld [vmem:[%s3 + $0x18] sm:$0xf]
  %v51 = vld [vmem:[%s3 + $0x1c] sm:$0xf]
  %v52 = vld [vmem:[%s4] sm:$0xff]
  %v53 = vld [vmem:[%s4 + $0x8] sm:$0xff]
  %v54 = vld [vmem:[%s4 + $0x10] sm:$0xff]
  %v55 = vld [vmem:[%s4 + $0x18] sm:$0xff]
  %v56 = vld [vmem:[%s4 + $0x20] sm:$0xff]
  %v57 = vld [vmem:[%s4 + $0x28] sm:$0xff]
  %v58 = vld [vmem:[%s4 + $0x30] sm:$0xff]
  %v59 = vld [vmem:[%s4 + $0x38] sm:$0xff]
  %v60 = vld [vmem:[%s5] sm:$0xff]
  %v61 = vld [vmem:[%s5 + $0x8] sm:$0xff]
  %v62 = vld [vmem:[%s5 + $0x10] sm:$0xff]
  %v63 = vld [vmem:[%s5 + $0x18] sm:$0xff]
  %v64 = vld [vmem:[%s5 + $0x20] sm:$0xff]
  %v65 = vld [vmem:[%s5 + $0x28] sm:$0xff]
  %v66 = vld [vmem:[%s5 + $0x30] sm:$0xff]
  %v67 = vld [vmem:[%s5 + $0x38] sm:$0xff]
  %s68 = sld [smem:[#allocation2]]
  %v69 = vld [vmem:[%s0] sm:$0x77]
  %v70 = vld [vmem:[%s0 + $0x8] sm:$0x77]
  %72 = vset.pattern.permute.xlu0 0
  %73 = vperm.xlu0 %72, %v28
  %v74 = vpop.permute.xlu0 %73
  %77 = vset.pattern.permute.xlu0 0
  %78 = vperm.xlu0 %77, %v29
  %v79 = vpop.permute.xlu0 %78
  %82 = vset.pattern.permute.xlu0 0
  %83 = vperm.xlu0 %82, %v30
  %v84 = vpop.permute.xlu0 %83
  %87 = vset.pattern.permute.xlu0 0
  %88 = vperm.xlu0 %87, %v31
  %v89 = vpop.permute.xlu0 %88
  %92 = vset.pattern.permute.xlu0 0
  %93 = vperm.xlu0 %92, %v32
  %v94 = vpop.permute.xlu0 %93
  %97 = vset.pattern.permute.xlu0 0
  %98 = vperm.xlu0 %97, %v33
  %v99 = vpop.permute.xlu0 %98
  %102 = vset.pattern.permute.xlu0 0
  %103 = vperm.xlu0 %102, %v34
  %v104 = vpop.permute.xlu0 %103
  %107 = vset.pattern.permute.xlu0 0
  %108 = vperm.xlu0 %107, %v35
  %v109 = vpop.permute.xlu0 %108
  %v113 = vlaneseq
  %v114 = vshrl.u32 %v113, 7
  %v115 = vsub.s32 0, %v114
  %v116 = vrot.slane %v69, %v115
  %v117 = vlaneseq
  %v118 = vshrl.u32 %v117, 7
  %v119 = vsub.s32 4, %v118
  %v120 = vrot.slane %v69, %v119
  %v121 = vlaneseq
  %v122 = vshrl.u32 %v121, 7
  %v123 = vsub.s32 0, %v122
  %v124 = vrot.slane %v70, %v123
  %v125 = vlaneseq
  %v126 = vshrl.u32 %v125, 7
  %v127 = vsub.s32 4, %v126
  %v128 = vrot.slane %v70, %v127
  %v133 = vlaneseq
  %v134 = vshrl.u32 %v133, 7
  %v135 = vsub.s32 0, %v134
  %v136 = vrot.slane %v116, %v135
  %v137 = vlaneseq
  %v138 = vshrl.u32 %v137, 7
  %v139 = vsub.s32 0, %v138
  %v140 = vrot.slane %v120, %v139
  %v141 = vlaneseq
  %v142 = vshrl.u32 %v141, 7
  %v143 = vsub.s32 0, %v142
  %v144 = vrot.slane %v124, %v143
  %v145 = vlaneseq
  %v146 = vshrl.u32 %v145, 7
  %v147 = vsub.s32 0, %v146
  %v148 = vrot.slane %v128, %v147
  %v149 = vmul.f32 %v74, %v136
  %v150 = vmul.f32 %v74, %v140
  %v151 = vmul.f32 %v74, %v144
  %v152 = vmul.f32 %v74, %v148
  %v153 = vmul.f32 %v79, %v136
  %v154 = vmul.f32 %v79, %v140
  %v155 = vmul.f32 %v79, %v144
  %v156 = vmul.f32 %v79, %v148
  %v157 = vmul.f32 %v84, %v136
  %v158 = vmul.f32 %v84, %v140
  %v159 = vmul.f32 %v84, %v144
  %v160 = vmul.f32 %v84, %v148
  %v161 = vmul.f32 %v89, %v136
  %v162 = vmul.f32 %v89, %v140
  %v163 = vmul.f32 %v89, %v144
  %v164 = vmul.f32 %v89, %v148
  %v165 = vmul.f32 %v94, %v136
  %v166 = vmul.f32 %v94, %v140
  %v167 = vmul.f32 %v94, %v144
  %v168 = vmul.f32 %v94, %v148
  %v169 = vmul.f32 %v99, %v136
  %v170 = vmul.f32 %v99, %v140
  %v171 = vmul.f32 %v99, %v144
  %v172 = vmul.f32 %v99, %v148
  %v173 = vmul.f32 %v104, %v136
  %v174 = vmul.f32 %v104, %v140
  %v175 = vmul.f32 %v104, %v144
  %v176 = vmul.f32 %v104, %v148
  %v177 = vmul.f32 %v109, %v136
  %v178 = vmul.f32 %v109, %v140
  %v179 = vmul.f32 %v109, %v144
  %v180 = vmul.f32 %v109, %v148
  %181 = vset.pattern.permute.xlu0 1
  %182 = vperm.xlu0 %181, %v28
  %v183 = vpop.permute.xlu0 %182
  %185 = vset.pattern.permute.xlu0 1
  %186 = vperm.xlu0 %185, %v29
  %v187 = vpop.permute.xlu0 %186
  %189 = vset.pattern.permute.xlu0 1
  %190 = vperm.xlu0 %189, %v30
  %v191 = vpop.permute.xlu0 %190
  %193 = vset.pattern.permute.xlu0 1
  %194 = vperm.xlu0 %193, %v31
  %v195 = vpop.permute.xlu0 %194
  %197 = vset.pattern.permute.xlu0 1
  %198 = vperm.xlu0 %197, %v32
  %v199 = vpop.permute.xlu0 %198
  %201 = vset.pattern.permute.xlu0 1
  %202 = vperm.xlu0 %201, %v33
  %v203 = vpop.permute.xlu0 %202
  %205 = vset.pattern.permute.xlu0 1
  %206 = vperm.xlu0 %205, %v34
  %v207 = vpop.permute.xlu0 %206
  %209 = vset.pattern.permute.xlu0 1
  %210 = vperm.xlu0 %209, %v35
  %v211 = vpop.permute.xlu0 %210
  %v213 = vlaneseq
  %v214 = vshrl.u32 %v213, 7
  %v215 = vsub.s32 1, %v214
  %v216 = vrot.slane %v69, %v215
  %v217 = vlaneseq
  %v218 = vshrl.u32 %v217, 7
  %v219 = vsub.s32 5, %v218
  %v220 = vrot.slane %v69, %v219
  %v221 = vlaneseq
  %v222 = vshrl.u32 %v221, 7
  %v223 = vsub.s32 1, %v222
  %v224 = vrot.slane %v70, %v223
  %v225 = vlaneseq
  %v226 = vshrl.u32 %v225, 7
  %v227 = vsub.s32 5, %v226
  %v228 = vrot.slane %v70, %v227
  %v233 = vlaneseq
  %v234 = vshrl.u32 %v233, 7
  %v235 = vsub.s32 1, %v234
  %v236 = vrot.slane %v216, %v235
  %v237 = vlaneseq
  %v238 = vshrl.u32 %v237, 7
  %v239 = vsub.s32 1, %v238
  %v240 = vrot.slane %v220, %v239
  %v241 = vlaneseq
  %v242 = vshrl.u32 %v241, 7
  %v243 = vsub.s32 1, %v242
  %v244 = vrot.slane %v224, %v243
  %v245 = vlaneseq
  %v246 = vshrl.u32 %v245, 7
  %v247 = vsub.s32 1, %v246
  %v248 = vrot.slane %v228, %v247
  %v249 = vmul.f32 %v183, %v236
  %v250 = vmul.f32 %v183, %v240
  %v251 = vmul.f32 %v183, %v244
  %v252 = vmul.f32 %v183, %v248
  %v253 = vmul.f32 %v187, %v236
  %v254 = vmul.f32 %v187, %v240
  %v255 = vmul.f32 %v187, %v244
  %v256 = vmul.f32 %v187, %v248
  %v257 = vmul.f32 %v191, %v236
  %v258 = vmul.f32 %v191, %v240
  %v259 = vmul.f32 %v191, %v244
  %v260 = vmul.f32 %v191, %v248
  %v261 = vmul.f32 %v195, %v236
  %v262 = vmul.f32 %v195, %v240
  %v263 = vmul.f32 %v195, %v244
  %v264 = vmul.f32 %v195, %v248
  %v265 = vmul.f32 %v199, %v236
  %v266 = vmul.f32 %v199, %v240
  %v267 = vmul.f32 %v199, %v244
  %v268 = vmul.f32 %v199, %v248
  %v269 = vmul.f32 %v203, %v236
  %v270 = vmul.f32 %v203, %v240
  %v271 = vmul.f32 %v203, %v244
  %v272 = vmul.f32 %v203, %v248
  %v273 = vmul.f32 %v207, %v236
  %v274 = vmul.f32 %v207, %v240
  %v275 = vmul.f32 %v207, %v244
  %v276 = vmul.f32 %v207, %v248
  %v277 = vmul.f32 %v211, %v236
  %v278 = vmul.f32 %v211, %v240
  %v279 = vmul.f32 %v211, %v244
  %v280 = vmul.f32 %v211, %v248
  %v281 = vadd.f32 %v149, %v249
  %v282 = vadd.f32 %v150, %v250
  %v283 = vadd.f32 %v151, %v251
  %v284 = vadd.f32 %v152, %v252
  %v285 = vadd.f32 %v153, %v253
  %v286 = vadd.f32 %v154, %v254
  %v287 = vadd.f32 %v155, %v255
  %v288 = vadd.f32 %v156, %v256
  %v289 = vadd.f32 %v157, %v257
  %v290 = vadd.f32 %v158, %v258
  %v291 = vadd.f32 %v159, %v259
  %v292 = vadd.f32 %v160, %v260
  %v293 = vadd.f32 %v161, %v261
  %v294 = vadd.f32 %v162, %v262
  %v295 = vadd.f32 %v163, %v263
  %v296 = vadd.f32 %v164, %v264
  %v297 = vadd.f32 %v165, %v265
  %v298 = vadd.f32 %v166, %v266
  %v299 = vadd.f32 %v167, %v267
  %v300 = vadd.f32 %v168, %v268
  %v301 = vadd.f32 %v169, %v269
  %v302 = vadd.f32 %v170, %v270
  %v303 = vadd.f32 %v171, %v271
  %v304 = vadd.f32 %v172, %v272
  %v305 = vadd.f32 %v173, %v273
  %v306 = vadd.f32 %v174, %v274
  %v307 = vadd.f32 %v175, %v275
  %v308 = vadd.f32 %v176, %v276
  %v309 = vadd.f32 %v177, %v277
  %v310 = vadd.f32 %v178, %v278
  %v311 = vadd.f32 %v179, %v279
  %v312 = vadd.f32 %v180, %v280
  %313 = vset.pattern.permute.xlu0 2
  %314 = vperm.xlu0 %313, %v28
  %v315 = vpop.permute.xlu0 %314
  %317 = vset.pattern.permute.xlu0 2
  %318 = vperm.xlu0 %317, %v29
  %v319 = vpop.permute.xlu0 %318
  %321 = vset.pattern.permute.xlu0 2
  %322 = vperm.xlu0 %321, %v30
  %v323 = vpop.permute.xlu0 %322
  %325 = vset.pattern.permute.xlu0 2
  %326 = vperm.xlu0 %325, %v31
  %v327 = vpop.permute.xlu0 %326
  %329 = vset.pattern.permute.xlu0 2
  %330 = vperm.xlu0 %329, %v32
  %v331 = vpop.permute.xlu0 %330
  %333 = vset.pattern.permute.xlu0 2
  %334 = vperm.xlu0 %333, %v33
  %v335 = vpop.permute.xlu0 %334
  %337 = vset.pattern.permute.xlu0 2
  %338 = vperm.xlu0 %337, %v34
  %v339 = vpop.permute.xlu0 %338
  %341 = vset.pattern.permute.xlu0 2
  %342 = vperm.xlu0 %341, %v35
  %v343 = vpop.permute.xlu0 %342
  %v345 = vlaneseq
  %v346 = vshrl.u32 %v345, 7
  %v347 = vsub.s32 2, %v346
  %v348 = vrot.slane %v69, %v347
  %v349 = vlaneseq
  %v350 = vshrl.u32 %v349, 7
  %v351 = vsub.s32 6, %v350
  %v352 = vrot.slane %v69, %v351
  %v353 = vlaneseq
  %v354 = vshrl.u32 %v353, 7
  %v355 = vsub.s32 2, %v354
  %v356 = vrot.slane %v70, %v355
  %v357 = vlaneseq
  %v358 = vshrl.u32 %v357, 7
  %v359 = vsub.s32 6, %v358
  %v360 = vrot.slane %v70, %v359
  %v365 = vlaneseq
  %v366 = vshrl.u32 %v365, 7
  %v367 = vsub.s32 2, %v366
  %v368 = vrot.slane %v348, %v367
  %v369 = vlaneseq
  %v370 = vshrl.u32 %v369, 7
  %v371 = vsub.s32 2, %v370
  %v372 = vrot.slane %v352, %v371
  %v373 = vlaneseq
  %v374 = vshrl.u32 %v373, 7
  %v375 = vsub.s32 2, %v374
  %v376 = vrot.slane %v356, %v375
  %v377 = vlaneseq
  %v378 = vshrl.u32 %v377, 7
  %v379 = vsub.s32 2, %v378
  %v380 = vrot.slane %v360, %v379
  %v381 = vmul.f32 %v315, %v368
  %v382 = vmul.f32 %v315, %v372
  %v383 = vmul.f32 %v315, %v376
  %v384 = vmul.f32 %v315, %v380
  %v385 = vmul.f32 %v319, %v368
  %v386 = vmul.f32 %v319, %v372
  %v387 = vmul.f32 %v319, %v376
  %v388 = vmul.f32 %v319, %v380
  %v389 = vmul.f32 %v323, %v368
  %v390 = vmul.f32 %v323, %v372
  %v391 = vmul.f32 %v323, %v376
  %v392 = vmul.f32 %v323, %v380
  %v393 = vmul.f32 %v327, %v368
  %v394 = vmul.f32 %v327, %v372
  %v395 = vmul.f32 %v327, %v376
  %v396 = vmul.f32 %v327, %v380
  %v397 = vmul.f32 %v331, %v368
  %v398 = vmul.f32 %v331, %v372
  %v399 = vmul.f32 %v331, %v376
  %v400 = vmul.f32 %v331, %v380
  %v401 = vmul.f32 %v335, %v368
  %v402 = vmul.f32 %v335, %v372
  %v403 = vmul.f32 %v335, %v376
  %v404 = vmul.f32 %v335, %v380
  %v405 = vmul.f32 %v339, %v368
  %v406 = vmul.f32 %v339, %v372
  %v407 = vmul.f32 %v339, %v376
  %v408 = vmul.f32 %v339, %v380
  %v409 = vmul.f32 %v343, %v368
  %v410 = vmul.f32 %v343, %v372
  %v411 = vmul.f32 %v343, %v376
  %v412 = vmul.f32 %v343, %v380
  %v413 = vadd.f32 %v281, %v381
  %v414 = vadd.f32 %v282, %v382
  %v415 = vadd.f32 %v283, %v383
  %v416 = vadd.f32 %v284, %v384
  %v417 = vadd.f32 %v285, %v385
  %v418 = vadd.f32 %v286, %v386
  %v419 = vadd.f32 %v287, %v387
  %v420 = vadd.f32 %v288, %v388
  %v421 = vadd.f32 %v289, %v389
  %v422 = vadd.f32 %v290, %v390
  %v423 = vadd.f32 %v291, %v391
  %v424 = vadd.f32 %v292, %v392
  %v425 = vadd.f32 %v293, %v393
  %v426 = vadd.f32 %v294, %v394
  %v427 = vadd.f32 %v295, %v395
  %v428 = vadd.f32 %v296, %v396
  %v429 = vadd.f32 %v297, %v397
  %v430 = vadd.f32 %v298, %v398
  %v431 = vadd.f32 %v299, %v399
  %v432 = vadd.f32 %v300, %v400
  %v433 = vadd.f32 %v301, %v401
  %v434 = vadd.f32 %v302, %v402
  %v435 = vadd.f32 %v303, %v403
  %v436 = vadd.f32 %v304, %v404
  %v437 = vadd.f32 %v305, %v405
  %v438 = vadd.f32 %v306, %v406
  %v439 = vadd.f32 %v307, %v407
  %v440 = vadd.f32 %v308, %v408
  %v441 = vadd.f32 %v309, %v409
  %v442 = vadd.f32 %v310, %v410
  %v443 = vadd.f32 %v311, %v411
  %v444 = vadd.f32 %v312, %v412
  %446 = vset.pattern.permute.xlu0 0
  %447 = vperm.xlu0 %446, %v36
  %v448 = vpop.permute.xlu0 %447
  %451 = vset.pattern.permute.xlu0 0
  %452 = vperm.xlu0 %451, %v37
  %v453 = vpop.permute.xlu0 %452
  %456 = vset.pattern.permute.xlu0 0
  %457 = vperm.xlu0 %456, %v38
  %v458 = vpop.permute.xlu0 %457
  %461 = vset.pattern.permute.xlu0 0
  %462 = vperm.xlu0 %461, %v39
  %v463 = vpop.permute.xlu0 %462
  %466 = vset.pattern.permute.xlu0 0
  %467 = vperm.xlu0 %466, %v40
  %v468 = vpop.permute.xlu0 %467
  %471 = vset.pattern.permute.xlu0 0
  %472 = vperm.xlu0 %471, %v41
  %v473 = vpop.permute.xlu0 %472
  %476 = vset.pattern.permute.xlu0 0
  %477 = vperm.xlu0 %476, %v42
  %v478 = vpop.permute.xlu0 %477
  %481 = vset.pattern.permute.xlu0 0
  %482 = vperm.xlu0 %481, %v43
  %v483 = vpop.permute.xlu0 %482
  %v485 = vadd.f32 %v413, %v448
  %v486 = vadd.f32 %v414, %v448
  %v487 = vadd.f32 %v415, %v448
  %v488 = vadd.f32 %v416, %v448
  %v489 = vadd.f32 %v417, %v453
  %v490 = vadd.f32 %v418, %v453
  %v491 = vadd.f32 %v419, %v453
  %v492 = vadd.f32 %v420, %v453
  %v493 = vadd.f32 %v421, %v458
  %v494 = vadd.f32 %v422, %v458
  %v495 = vadd.f32 %v423, %v458
  %v496 = vadd.f32 %v424, %v458
  %v497 = vadd.f32 %v425, %v463
  %v498 = vadd.f32 %v426, %v463
  %v499 = vadd.f32 %v427, %v463
  %v500 = vadd.f32 %v428, %v463
  %v501 = vadd.f32 %v429, %v468
  %v502 = vadd.f32 %v430, %v468
  %v503 = vadd.f32 %v431, %v468
  %v504 = vadd.f32 %v432, %v468
  %v505 = vadd.f32 %v433, %v473
  %v506 = vadd.f32 %v434, %v473
  %v507 = vadd.f32 %v435, %v473
  %v508 = vadd.f32 %v436, %v473
  %v509 = vadd.f32 %v437, %v478
  %v510 = vadd.f32 %v438, %v478
  %v511 = vadd.f32 %v439, %v478
  %v512 = vadd.f32 %v440, %v478
  %v513 = vadd.f32 %v441, %v483
  %v514 = vadd.f32 %v442, %v483
  %v515 = vadd.f32 %v443, %v483
  %v516 = vadd.f32 %v444, %v483
  %v517 = vmax.f32 %v485, 0.0
  %v518 = vmax.f32 %v486, 0.0
  %v519 = vmax.f32 %v487, 0.0
  %v520 = vmax.f32 %v488, 0.0
  %v521 = vmax.f32 %v489, 0.0
  %v522 = vmax.f32 %v490, 0.0
  %v523 = vmax.f32 %v491, 0.0
  %v524 = vmax.f32 %v492, 0.0
  %v525 = vmax.f32 %v493, 0.0
  %v526 = vmax.f32 %v494, 0.0
  %v527 = vmax.f32 %v495, 0.0
  %v528 = vmax.f32 %v496, 0.0
  %v529 = vmax.f32 %v497, 0.0
  %v530 = vmax.f32 %v498, 0.0
  %v531 = vmax.f32 %v499, 0.0
  %v532 = vmax.f32 %v500, 0.0
  %v533 = vmax.f32 %v501, 0.0
  %v534 = vmax.f32 %v502, 0.0
  %v535 = vmax.f32 %v503, 0.0
  %v536 = vmax.f32 %v504, 0.0
  %v537 = vmax.f32 %v505, 0.0
  %v538 = vmax.f32 %v506, 0.0
  %v539 = vmax.f32 %v507, 0.0
  %v540 = vmax.f32 %v508, 0.0
  %v541 = vmax.f32 %v509, 0.0
  %v542 = vmax.f32 %v510, 0.0
  %v543 = vmax.f32 %v511, 0.0
  %v544 = vmax.f32 %v512, 0.0
  %v545 = vmax.f32 %v513, 0.0
  %v546 = vmax.f32 %v514, 0.0
  %v547 = vmax.f32 %v515, 0.0
  %v548 = vmax.f32 %v516, 0.0
  %v549 = vpack.c.bf16 %v521, %v517
  %v550 = vpack.c.bf16 %v522, %v518
  %v551 = vpack.c.bf16 %v523, %v519
  %v552 = vpack.c.bf16 %v524, %v520
  %v553 = vpack.c.bf16 %v529, %v525
  %v554 = vpack.c.bf16 %v530, %v526
  %v555 = vpack.c.bf16 %v531, %v527
  %v556 = vpack.c.bf16 %v532, %v528
  %v557 = vpack.c.bf16 %v537, %v533
  %v558 = vpack.c.bf16 %v538, %v534
  %v559 = vpack.c.bf16 %v539, %v535
  %v560 = vpack.c.bf16 %v540, %v536
  %v561 = vpack.c.bf16 %v545, %v541
  %v562 = vpack.c.bf16 %v546, %v542
  %v563 = vpack.c.bf16 %v547, %v543
  %v564 = vpack.c.bf16 %v548, %v544
  %566 = vset.pattern.permute.xlu0 0
  %567 = vperm.xlu0 %566, %v52
  %v568 = vpop.permute.xlu0 %567
  %571 = vset.pattern.permute.xlu0 0
  %572 = vperm.xlu0 %571, %v53
  %v573 = vpop.permute.xlu0 %572
  %576 = vset.pattern.permute.xlu0 0
  %577 = vperm.xlu0 %576, %v54
  %v578 = vpop.permute.xlu0 %577
  %581 = vset.pattern.permute.xlu0 0
  %582 = vperm.xlu0 %581, %v55
  %v583 = vpop.permute.xlu0 %582
  %586 = vset.pattern.permute.xlu0 0
  %587 = vperm.xlu0 %586, %v56
  %v588 = vpop.permute.xlu0 %587
  %591 = vset.pattern.permute.xlu0 0
  %592 = vperm.xlu0 %591, %v57
  %v593 = vpop.permute.xlu0 %592
  %596 = vset.pattern.permute.xlu0 0
  %597 = vperm.xlu0 %596, %v58
  %v598 = vpop.permute.xlu0 %597
  %601 = vset.pattern.permute.xlu0 0
  %602 = vperm.xlu0 %601, %v59
  %v603 = vpop.permute.xlu0 %602
  %v613 = vunpack.c.l.b16 %v44
  %v614 = vunpack.c.l.b16 %v45
  %v615 = vunpack.c.l.b16 %v46
  %v616 = vunpack.c.l.b16 %v47
  %v617 = vunpack.c.l.b16 %v48
  %v618 = vunpack.c.l.b16 %v49
  %v619 = vunpack.c.l.b16 %v50
  %v620 = vunpack.c.l.b16 %v51
  %v621 = vpack.c.b16 %v614, %v613
  %v622 = vpack.c.b16 %v616, %v615
  %v623 = vpack.c.b16 %v618, %v617
  %v624 = vpack.c.b16 %v620, %v619
  %vm625 = vcmask 523264
  %v627 = vsel %vm625, %v621, 0
  %v630 = vsel %vm625, %v622, 0
  %v633 = vsel %vm625, %v623, 0
  %v636 = vsel %vm625, %v624, 0
  %638 = vmatprep.subr.bf16.mxu0 %v550
  %639 = vmatpush1.bf16.msra.mxu0 %v549
  %640 = vmatprep.subr.bf16.mxu0 %v554
  %641 = vmatpush1.bf16.msra.mxu0 %v553
  %642 = vmatprep.subr.bf16.mxu0 %v558
  %643 = vmatpush1.bf16.msra.mxu0 %v557
  %644 = vmatprep.subr.bf16.mxu0 %v562
  %645 = vmatpush1.bf16.msra.mxu0 %v561
  %646 = vmatprep.subr.bf16.mxu0 0
  %647 = vmatpush1.bf16.msra.mxu0 0
  %648 = vmatprep.subr.bf16.mxu0 0
  %649 = vmatpush1.bf16.msra.mxu0 0
  %650 = vmatprep.subr.bf16.mxu0 0
  %651 = vmatpush1.bf16.msra.mxu0 0
  %652 = vmatprep.subr.bf16.mxu0 0
  %653 = vmatpush1.bf16.msra.mxu0 0
  %654 = vmatprep.subr.bf16.mxu0 0
  %655 = vmatpush1.bf16.msra.mxu0 0
  %656 = vmatprep.subr.bf16.mxu0 0
  %657 = vmatpush1.bf16.msra.mxu0 0
  %658 = vmatprep.subr.bf16.mxu0 0
  %659 = vmatpush1.bf16.msra.mxu0 0
  %660 = vmatprep.subr.bf16.mxu0 0
  %661 = vmatpush1.bf16.msra.mxu0 0
  %662 = vmatprep.subr.bf16.mxu0 0
  %663 = vmatpush1.bf16.msra.mxu0 0
  %664 = vmatprep.subr.bf16.mxu0 0
  %665 = vmatpush1.bf16.msra.mxu0 0
  %666 = vmatprep.subr.bf16.mxu0 0
  %667 = vmatpush1.bf16.msra.mxu0 0
  %668 = vmatprep.subr.bf16.mxu0 0
  %669 = vmatpush1.bf16.msra.mxu0 0
  %670 = vmatprep.mubr.bf16.mxu0 0
  %671 = vmatmul.mubr.bf16.gmra.mrb[0].mxu0 %v627
  %v672 = vpop.f32.mrb[0].mxu0
  %v673 = vadd.f32 %v568, %v672
  %v674 = vpop.f32.mrb[0].mxu0
  %v675 = vadd.f32 %v568, %v674
  %v676 = vpop.f32.mrb[0].mxu0
  %v677 = vadd.f32 %v573, %v676
  %v678 = vpop.f32.mrb[0].mxu0
  %v679 = vadd.f32 %v573, %v678
  %680 = vmatprep.mubr.bf16.mxu0 0
  %681 = vmatmul.mubr.bf16.gmra.mrb[0].mxu0 %v630
  %v682 = vpop.f32.mrb[0].mxu0
  %v683 = vadd.f32 %v578, %v682
  %v684 = vpop.f32.mrb[0].mxu0
  %v685 = vadd.f32 %v578, %v684
  %v686 = vpop.f32.mrb[0].mxu0
  %v687 = vadd.f32 %v583, %v686
  %v688 = vpop.f32.mrb[0].mxu0
  %v689 = vadd.f32 %v583, %v688
  %690 = vmatprep.mubr.bf16.mxu0 0
  %691 = vmatmul.mubr.bf16.gmra.mrb[0].mxu0 %v633
  %v692 = vpop.f32.mrb[0].mxu0
  %v693 = vadd.f32 %v588, %v692
  %v694 = vpop.f32.mrb[0].mxu0
  %v695 = vadd.f32 %v588, %v694
  %v696 = vpop.f32.mrb[0].mxu0
  %v697 = vadd.f32 %v593, %v696
  %v698 = vpop.f32.mrb[0].mxu0
  %v699 = vadd.f32 %v593, %v698
  %700 = vmatprep.mubr.bf16.mxu0 0
  %701 = vmatmul.mubr.bf16.gmra.mrb[0].mxu0 %v636
  %v702 = vpop.f32.mrb[0].mxu0
  %v703 = vadd.f32 %v598, %v702
  %v704 = vpop.f32.mrb[0].mxu0
  %v705 = vadd.f32 %v598, %v704
  %v706 = vpop.f32.mrb[0].mxu0
  %v707 = vadd.f32 %v603, %v706
  %v708 = vpop.f32.mrb[0].mxu0
  %v709 = vadd.f32 %v603, %v708
  %710 = vdwg.mxu0
  %711 = vmatprep.subr.bf16.mxu0 %v552
  %712 = vmatpush1.bf16.msra.mxu0 %v551
  %713 = vmatprep.subr.bf16.mxu0 %v556
  %714 = vmatpush1.bf16.msra.mxu0 %v555
  %715 = vmatprep.subr.bf16.mxu0 %v560
  %716 = vmatpush1.bf16.msra.mxu0 %v559
  %717 = vmatprep.subr.bf16.mxu0 %v564
  %718 = vmatpush1.bf16.msra.mxu0 %v563
  %719 = vmatprep.subr.bf16.mxu0 0
  %720 = vmatpush1.bf16.msra.mxu0 0
  %721 = vmatprep.subr.bf16.mxu0 0
  %722 = vmatpush1.bf16.msra.mxu0 0
  %723 = vmatprep.subr.bf16.mxu0 0
  %724 = vmatpush1.bf16.msra.mxu0 0
  %725 = vmatprep.subr.bf16.mxu0 0
  %726 = vmatpush1.bf16.msra.mxu0 0
  %727 = vmatprep.subr.bf16.mxu0 0
  %728 = vmatpush1.bf16.msra.mxu0 0
  %729 = vmatprep.subr.bf16.mxu0 0
  %730 = vmatpush1.bf16.msra.mxu0 0
  %731 = vmatprep.subr.bf16.mxu0 0
  %732 = vmatpush1.bf16.msra.mxu0 0
  %733 = vmatprep.subr.bf16.mxu0 0
  %734 = vmatpush1.bf16.msra.mxu0 0
  %735 = vmatprep.subr.bf16.mxu0 0
  %736 = vmatpush1.bf16.msra.mxu0 0
  %737 = vmatprep.subr.bf16.mxu0 0
  %738 = vmatpush1.bf16.msra.mxu0 0
  %739 = vmatprep.subr.bf16.mxu0 0
  %740 = vmatpush1.bf16.msra.mxu0 0
  %741 = vmatprep.subr.bf16.mxu0 0
  %742 = vmatpush1.bf16.msra.mxu0 0
  %743 = vmatprep.mubr.bf16.mxu0 0
  %744 = vmatmul.mubr.bf16.gmra.mrb[0].mxu0 %v627
  %v745 = vpop.f32.mrb[0].mxu0
  %v746 = vadd.f32 %v568, %v745
  %v747 = vpop.f32.mrb[0].mxu0
  %v748 = vadd.f32 %v568, %v747
  %v749 = vpop.f32.mrb[0].mxu0
  %v750 = vadd.f32 %v573, %v749
  %v751 = vpop.f32.mrb[0].mxu0
  %v752 = vadd.f32 %v573, %v751
  %753 = vmatprep.mubr.bf16.mxu0 0
  %754 = vmatmul.mubr.bf16.gmra.mrb[0].mxu0 %v630
  %v755 = vpop.f32.mrb[0].mxu0
  %v756 = vadd.f32 %v578, %v755
  %v757 = vpop.f32.mrb[0].mxu0
  %v758 = vadd.f32 %v578, %v757
  %v759 = vpop.f32.mrb[0].mxu0
  %v760 = vadd.f32 %v583, %v759
  %v761 = vpop.f32.mrb[0].mxu0
  %v762 = vadd.f32 %v583, %v761
  %763 = vmatprep.mubr.bf16.mxu0 0
  %764 = vmatmul.mubr.bf16.gmra.mrb[0].mxu0 %v633
  %v765 = vpop.f32.mrb[0].mxu0
  %v766 = vadd.f32 %v588, %v765
  %v767 = vpop.f32.mrb[0].mxu0
  %v768 = vadd.f32 %v588, %v767
  %v769 = vpop.f32.mrb[0].mxu0
  %v770 = vadd.f32 %v593, %v769
  %v771 = vpop.f32.mrb[0].mxu0
  %v772 = vadd.f32 %v593, %v771
  %773 = vmatprep.mubr.bf16.mxu0 0
  %774 = vmatmul.mubr.bf16.gmra.mrb[0].mxu0 %v636
  %v775 = vpop.f32.mrb[0].mxu0
  %v776 = vadd.f32 %v598, %v775
  %v777 = vpop.f32.mrb[0].mxu0
  %v778 = vadd.f32 %v598, %v777
  %v779 = vpop.f32.mrb[0].mxu0
  %v780 = vadd.f32 %v603, %v779
  %v781 = vpop.f32.mrb[0].mxu0
  %v782 = vadd.f32 %v603, %v781
  %783 = vdwg.mxu0
  %v784 = vmax.f32 %v673, 0.0
  %v785 = vmax.f32 %v675, 0.0
  %v786 = vmax.f32 %v746, 0.0
  %v787 = vmax.f32 %v748, 0.0
  %v788 = vmax.f32 %v677, 0.0
  %v789 = vmax.f32 %v679, 0.0
  %v790 = vmax.f32 %v750, 0.0
  %v791 = vmax.f32 %v752, 0.0
  %v792 = vmax.f32 %v683, 0.0
  %v793 = vmax.f32 %v685, 0.0
  %v794 = vmax.f32 %v756, 0.0
  %v795 = vmax.f32 %v758, 0.0
  %v796 = vmax.f32 %v687, 0.0
  %v797 = vmax.f32 %v689, 0.0
  %v798 = vmax.f32 %v760, 0.0
  %v799 = vmax.f32 %v762, 0.0
  %v800 = vmax.f32 %v693, 0.0
  %v801 = vmax.f32 %v695, 0.0
  %v802 = vmax.f32 %v766, 0.0
  %v803 = vmax.f32 %v768, 0.0
  %v804 = vmax.f32 %v697, 0.0
  %v805 = vmax.f32 %v699, 0.0
  %v806 = vmax.f32 %v770, 0.0
  %v807 = vmax.f32 %v772, 0.0
  %v808 = vmax.f32 %v703, 0.0
  %v809 = vmax.f32 %v705, 0.0
  %v810 = vmax.f32 %v776, 0.0
  %v811 = vmax.f32 %v778, 0.0
  %v812 = vmax.f32 %v707, 0.0
  %v813 = vmax.f32 %v709, 0.0
  %v814 = vmax.f32 %v780, 0.0
  %v815 = vmax.f32 %v782, 0.0
  %817 = vset.pattern.permute.xlu0 0
  %818 = vperm.xlu0 %817, %v60
  %v819 = vpop.permute.xlu0 %818
  %822 = vset.pattern.permute.xlu0 0
  %823 = vperm.xlu0 %822, %v61
  %v824 = vpop.permute.xlu0 %823
  %827 = vset.pattern.permute.xlu0 0
  %828 = vperm.xlu0 %827, %v62
  %v829 = vpop.permute.xlu0 %828
  %832 = vset.pattern.permute.xlu0 0
  %833 = vperm.xlu0 %832, %v63
  %v834 = vpop.permute.xlu0 %833
  %837 = vset.pattern.permute.xlu0 0
  %838 = vperm.xlu0 %837, %v64
  %v839 = vpop.permute.xlu0 %838
  %842 = vset.pattern.permute.xlu0 0
  %843 = vperm.xlu0 %842, %v65
  %v844 = vpop.permute.xlu0 %843
  %847 = vset.pattern.permute.xlu0 0
  %848 = vperm.xlu0 %847, %v66
  %v849 = vpop.permute.xlu0 %848
  %852 = vset.pattern.permute.xlu0 0
  %853 = vperm.xlu0 %852, %v67
  %v854 = vpop.permute.xlu0 %853
  %v856 = vmul.f32 %v819, %v784
  %v857 = vmul.f32 %v819, %v785
  %v858 = vmul.f32 %v819, %v786
  %v859 = vmul.f32 %v819, %v787
  %v860 = vmul.f32 %v824, %v788
  %v861 = vmul.f32 %v824, %v789
  %v862 = vmul.f32 %v824, %v790
  %v863 = vmul.f32 %v824, %v791
  %v864 = vmul.f32 %v829, %v792
  %v865 = vmul.f32 %v829, %v793
  %v866 = vmul.f32 %v829, %v794
  %v867 = vmul.f32 %v829, %v795
  %v868 = vmul.f32 %v834, %v796
  %v869 = vmul.f32 %v834, %v797
  %v870 = vmul.f32 %v834, %v798
  %v871 = vmul.f32 %v834, %v799
  %v872 = vmul.f32 %v839, %v800
  %v873 = vmul.f32 %v839, %v801
  %v874 = vmul.f32 %v839, %v802
  %v875 = vmul.f32 %v839, %v803
  %v876 = vmul.f32 %v844, %v804
  %v877 = vmul.f32 %v844, %v805
  %v878 = vmul.f32 %v844, %v806
  %v879 = vmul.f32 %v844, %v807
  %v880 = vmul.f32 %v849, %v808
  %v881 = vmul.f32 %v849, %v809
  %v882 = vmul.f32 %v849, %v810
  %v883 = vmul.f32 %v849, %v811
  %v884 = vmul.f32 %v854, %v812
  %v885 = vmul.f32 %v854, %v813
  %v886 = vmul.f32 %v854, %v814
  %v887 = vmul.f32 %v854, %v815
  %v888 = vadd.f32 %v856, %v860
  %v889 = vadd.f32 %v888, %v864
  %v890 = vadd.f32 %v889, %v868
  %v891 = vadd.f32 %v890, %v872
  %v892 = vadd.f32 %v891, %v876
  %v893 = vadd.f32 %v892, %v880
  %v894 = vadd.f32 %v893, %v884
  %v895 = vrot.slane %v894, 4
  %v896 = vadd.f32 %v894, %v895
  %v897 = vrot.slane %v896, 2
  %v898 = vadd.f32 %v896, %v897
  %v899 = vrot.slane %v898, 1
  %v900 = vadd.f32 %v898, %v899
  %v901 = vadd.f32 %v857, %v861
  %v902 = vadd.f32 %v901, %v865
  %v903 = vadd.f32 %v902, %v869
  %v904 = vadd.f32 %v903, %v873
  %v905 = vadd.f32 %v904, %v877
  %v906 = vadd.f32 %v905, %v881
  %v907 = vadd.f32 %v906, %v885
  %v908 = vrot.slane %v907, 4
  %v909 = vadd.f32 %v907, %v908
  %v910 = vrot.slane %v909, 2
  %v911 = vadd.f32 %v909, %v910
  %v912 = vrot.slane %v911, 1
  %v913 = vadd.f32 %v911, %v912
  %v914 = vadd.f32 %v858, %v862
  %v915 = vadd.f32 %v914, %v866
  %v916 = vadd.f32 %v915, %v870
  %v917 = vadd.f32 %v916, %v874
  %v918 = vadd.f32 %v917, %v878
  %v919 = vadd.f32 %v918, %v882
  %v920 = vadd.f32 %v919, %v886
  %v921 = vrot.slane %v920, 4
  %v922 = vadd.f32 %v920, %v921
  %v923 = vrot.slane %v922, 2
  %v924 = vadd.f32 %v922, %v923
  %v925 = vrot.slane %v924, 1
  %v926 = vadd.f32 %v924, %v925
  %v927 = vadd.f32 %v859, %v863
  %v928 = vadd.f32 %v927, %v867
  %v929 = vadd.f32 %v928, %v871
  %v930 = vadd.f32 %v929, %v875
  %v931 = vadd.f32 %v930, %v879
  %v932 = vadd.f32 %v931, %v883
  %v933 = vadd.f32 %v932, %v887
  %v934 = vrot.slane %v933, 4
  %v935 = vadd.f32 %v933, %v934
  %v936 = vrot.slane %v935, 2
  %v937 = vadd.f32 %v935, %v936
  %v938 = vrot.slane %v937, 1
  %v939 = vadd.f32 %v937, %v938
  %v940 = vstv %s68
  %v941 = vadd.f32 %v900, %v940
  %v942 = vadd.f32 %v913, %v940
  %v943 = vadd.f32 %v926, %v940
  %v944 = vadd.f32 %v939, %v940
  %v949 = vcombine.low %v941, %v942
  %v950 = vcombine.low %v943, %v944
  %v952 = vunpack.c.l.s4 1966171168
  %v953 = vunpack.c.0.s8 %v952
  %v954 = vlaneseq
  %v955 = vshrl.u32 %v954, 7
  %v956 = vsub.s32 %v953, %v955
  %v957 = vrot.slane %v949, %v956
  %v959 = vunpack.c.l.s4 1966171168
  %v960 = vunpack.c.0.s8 %v959
  %v961 = vlaneseq
  %v962 = vshrl.u32 %v961, 7
  %v963 = vsub.s32 %v960, %v962
  %v964 = vrot.slane %v950, %v963
  %v965 = vcombine.low %v957, %v964
  %v967 = vunpack.c.l.s4 1966171168
  %v968 = vunpack.c.0.s8 %v967
  %v969 = vlaneseq
  %v970 = vshrl.u32 %v969, 7
  %v971 = vsub.s32 %v968, %v970
  %v972 = vrot.slane %v965, %v971
  %v974 = vlaneseq
  %vm975 = vcmp.ge.s32.totalorder %v974, 0
  %vm976 = vcmp.lt.s32.totalorder %v974, 512
  %vm977 = vmand %vm975, %vm976
  %978 = vst.msk [vmem:[%s7] sm:$0xf] %vm977, %v972
  // Predicated region
  $region30: #{car_price_model.1} parent=0 // pred_check
    _
  $region31: #{car_price_model.1} parent=0 // pred_check_branch
    %980 = sbr.rel (0) target = $region33
  $region32: #{car_price_model.1} parent=0 // pred_region
    _
  $region33: #{car_price_model.1} parent=0 // pred_fallthru
    _
  // Predicated region
  $region34: #{car_price_model.1} parent=0 // pred_check
    _
  $region35: #{car_price_model.1} parent=0 // pred_check_branch
    %982 = sbr.rel (0) target = $region37
  $region36: #{car_price_model.1} parent=0 // pred_region
    _
  $region37: #{car_price_model.1} parent=0 // pred_fallthru
    _

</llo_original>
